<compile_context>
chip_gen: v5e
topology: v5e:2x2
jax: 0.10.0
libtpu: 0.0.40
codegen_flags: <defaults>
</compile_context>

<pallas_src>
import math

import jax
import jax.numpy as jnp
from jax.experimental import pallas as pl
from jax.experimental.pallas import tpu as pltpu

_CHUNK = 256                 # lanes of x processed per inner matmul (K dim)
_MAX_TILE = 2048             # cap on the time tile per grid step
_VMEM_BUDGET = 20 * 2**20    # target VMEM footprint (incl. double buffering)
_VMEM_LIMIT = 32 * 2**20     # scoped VMEM limit passed to Mosaic


def _pool_matrix(t: int, dtype):
    """(t, t//2) pair-average matrix: M[2j, j] = M[2j+1, j] = 0.5.

    x_chunk @ M == avg-pool(kernel=2, stride=2) of x_chunk along its last axis.
    Built once in the wrapper (host/XLA) and kept resident in VMEM.
    """
    return (0.5 * jnp.repeat(jnp.eye(t // 2, dtype=jnp.float32), 2, axis=0)).astype(dtype)


def _plan_tiling(t_even: int, n: int, ci: int, co: int, itemsize: int):
    """Choose (t_pad, chunk, time_tile, batch_block) under a VMEM budget."""
    if t_even <= _CHUNK:
        tc = t_even                      # single small chunk == whole (padded) T
        t_pad = t_even
    else:
        tc = _CHUNK
        t_pad = -(-t_even // _CHUNK) * _CHUNK

    divisors = [d for d in range(tc, t_pad + 1, tc) if t_pad % d == 0]

    def vmem_est(tt, nb):
        return (2 * nb * ci * tt * itemsize            # double-buffered x block
                + 2 * nb * co * (tt // 2) * itemsize   # double-buffered out block
                + co * ci * itemsize                   # resident 1x1 conv weight
                + tc * (tc // 2) * itemsize            # resident pool matrix
                + (1 << 20))                           # bias / headroom

    fitting = [d for d in divisors if d <= _MAX_TILE and vmem_est(d, 1) <= _VMEM_BUDGET]
    tt = max(fitting) if fitting else tc

    # Keep >= 2 grid steps when possible so dual-TensorCore chips (v7x) use both cores.
    if n == 1 and tt == t_pad and len(divisors) > 1:
        smaller = [d for d in divisors if d <= t_pad // 2 and vmem_est(d, 1) <= _VMEM_BUDGET]
        if smaller:
            tt = max(smaller)

    # Pack several batch rows per grid step when each step is tiny and N is large.
    nb = 1
    if t_pad // tt == 1 and n >= 4 and ci * tt * itemsize <= (128 << 10):
        for cand in (8, 4, 2):
            if n % cand == 0 and n // cand >= 2 and vmem_est(tt, cand) <= _VMEM_BUDGET:
                nb = cand
                break
    return t_pad, tc, tt, nb


def _avg2_pool_kernel(pool_ref, x_ref, o_ref):
    # pool_ref: (tc, tc//2)  resident pair-average matrix
    # x_ref:    (nb, Ci, tt) native dtype
    # o_ref:    (nb, Ci, tt//2)
    tc = pool_ref.shape[0]
    th = tc // 2
    nb, _, tt = x_ref.shape
    pool = pool_ref[...]
    for b in range(nb):
        for j in range(tt // tc):
            xc = x_ref[b, :, j * tc:(j + 1) * tc]                       # (Ci, tc)
            pooled = jnp.dot(xc, pool, preferred_element_type=jnp.float32)
            o_ref[b, :, j * th:(j + 1) * th] = pooled.astype(o_ref.dtype)


def _avg2_expand_kernel(pool_ref, w_ref, b_ref, x_ref, o_ref):
    # pool_ref: (tc, tc//2)  resident
    # w_ref:    (Co, Ci)     resident 1x1-conv weight (kernel dim squeezed)
    # b_ref:    (Co, 1)      resident f32 bias
    # x_ref:    (nb, Ci, tt) native dtype
    # o_ref:    (nb, Co, tt//2)
    tc = pool_ref.shape[0]
    th = tc // 2
    nb, _, tt = x_ref.shape
    pool = pool_ref[...]
    w = w_ref[...]
    bias = b_ref[...]                                                    # (Co, 1) f32
    for b in range(nb):
        for j in range(tt // tc):
            xc = x_ref[b, :, j * tc:(j + 1) * tc]                        # (Ci, tc)
            pooled = jnp.dot(xc, pool, preferred_element_type=jnp.float32)
            y = jnp.dot(w, pooled.astype(w.dtype),
                        preferred_element_type=jnp.float32)              # (Co, th) f32
            y = y + bias
            o_ref[b, :, j * th:(j + 1) * th] = y.astype(o_ref.dtype)


def downsample1d(x, weight=None, bias=None, *, pool_type="avg2"):
    """Pallas forward of Downsample1d with the module's default 'avg2' pool.

    x:      (N, C_in, T) float array (NCT layout, like PyTorch).
    weight: (C_out, C_in) or (C_out, C_in, 1) 1x1-conv 'expand' weight, or
            None for the dim == dim_out Identity path.
    bias:   (C_out,) or None.
    Returns (N, C_out, T // 2)  (C_out == C_in when weight is None).
    """
    if pool_type != "avg2":
        # TODO(synk): 'max', 'max2', 'avg' (k=3,s=2,p=1) and 'conv'/'conv2'
        # pool types are not implemented in Pallas; only the module's default
        # 'avg2' (+ optional 1x1 expand) configuration is.
        raise NotImplementedError(f"pool_type={pool_type!r} not implemented")

    N, Ci, T = x.shape
    T_out = T // 2
    if T_out == 0:
        raise ValueError("avg2 pooling needs a time length >= 2")
    T_even = 2 * T_out                           # PyTorch AvgPool1d(2,2) drops an odd tail
    x_in = x[..., :T_even] if T_even != T else x
    itemsize = jnp.dtype(x.dtype).itemsize

    if weight is not None:
        weight = jnp.asarray(weight)
        if weight.ndim == 3:                      # PyTorch (Co, Ci, 1)
            weight = weight[..., 0]
        Co = weight.shape[0]
        if weight.shape[1] != Ci:
            raise ValueError("weight / input channel mismatch")
    else:
        Co = Ci

    t_pad, tc, tt, nb = _plan_tiling(T_even, N, Ci, Co, itemsize)
    if t_pad != T_even:                           # pad to a multiple of the 256 chunk;
        x_in = jnp.pad(x_in, ((0, 0), (0, 0), (0, t_pad - T_even)))

    pool_mat = _pool_matrix(tc, x.dtype)
    grid = (N // nb, t_pad // tt)

    x_spec = pl.BlockSpec((nb, Ci, tt), lambda n, t: (n, 0, t))
    pool_spec = pl.BlockSpec((tc, tc // 2), lambda n, t: (0, 0))     # resident in VMEM
    out_spec = pl.BlockSpec((nb, Co, tt // 2), lambda n, t: (n, 0, t))

    compiler_params = pltpu.CompilerParams(
        dimension_semantics=("parallel", "parallel"),
        vmem_limit_bytes=_VMEM_LIMIT,
    )

    pool_flops = N * Ci * t_pad * tc              # chunked pair-average matmuls
    io_bytes = (N * Ci * t_pad + N * Co * (t_pad // 2)) * itemsize + pool_mat.size * itemsize

    if weight is None:
        cost = pl.CostEstimate(flops=int(pool_flops), transcendentals=0,
                               bytes_accessed=int(io_bytes))
        out = pl.pallas_call(
            _avg2_pool_kernel,
            out_shape=jax.ShapeDtypeStruct((N, Ci, t_pad // 2), x.dtype),
            grid=grid,
            in_specs=[pool_spec, x_spec],
            out_specs=out_spec,
            compiler_params=compiler_params,
            cost_estimate=cost,
        )(pool_mat, x_in)
    else:
        if bias is None:
            bias = jnp.zeros((Co,), jnp.float32)
        b2d = jnp.asarray(bias, jnp.float32).reshape(Co, 1)
        conv_flops = N * Co * Ci * t_pad
        cost = pl.CostEstimate(flops=int(pool_flops + conv_flops), transcendentals=0,
                               bytes_accessed=int(io_bytes + Co * Ci * itemsize))
        out = pl.pallas_call(
            _avg2_expand_kernel,
            out_shape=jax.ShapeDtypeStruct((N, Co, t_pad // 2), x.dtype),
            grid=grid,
            in_specs=[
                pool_spec,                                           # pool matrix: resident
                pl.BlockSpec((Co, Ci), lambda n, t: (0, 0)),         # weight:      resident
                pl.BlockSpec((Co, 1), lambda n, t: (0, 0)),          # bias:        resident
                x_spec,
            ],
            out_specs=out_spec,
            compiler_params=compiler_params,
            cost_estimate=cost,
        )(pool_mat, weight, b2d, x_in)

    if t_pad != T_even:
        out = out[..., :T_out]
    return out


def _reference(x, weight=None, bias=None):
    """Pure-JAX reference: AvgPool1d(2,2) then optional 1x1 Conv1d."""
    N, C, T = x.shape
    T_out = T // 2
    pooled = x[..., :2 * T_out].reshape(N, C, T_out, 2).mean(-1)
    if weight is None:
        return pooled
    y = jnp.einsum("oc,nct->not", weight, pooled,
                   precision=jax.lax.Precision.HIGHEST)
    return y + bias[None, :, None]


if __name__ == "__main__":
    key = jax.random.PRNGKey(0)

    # ---- Downsample1d(dim=32, dim_out=64, pool_type='avg2') at demo scale ----
    N, Ci, Co, T = 2, 32, 64, 16
    kx, kw, kb, kx2, kw2, kb2 = jax.random.split(key, 6)

    x = jax.random.normal(kx, (N, Ci, T), jnp.float32)
    limit = 1.0 / math.sqrt(Ci)                 # PyTorch Conv1d default init range
    w = jax.random.uniform(kw, (Co, Ci), jnp.float32, minval=-limit, maxval=limit)
    b = jax.random.uniform(kb, (Co,), jnp.float32, minval=-limit, maxval=limit)

    # Tolerances reflect default-precision MXU matmuls (bf16 operand rounding,
    # f32 accumulation) vs. the HIGHEST-precision reference.
    TOL = 5e-2

    # dim != dim_out -> avg2 pool fused with the 1x1-conv expand.
    out = jax.block_until_ready(downsample1d(x, w, b))
    ref = _reference(x, w, b)
    assert out.shape == (N, Co, T // 2), out.shape
    assert jnp.allclose(out, ref, atol=TOL, rtol=TOL), float(jnp.max(jnp.abs(out - ref)))

    # dim == dim_out -> expand is nn.Identity(); pooling only.
    out_id = jax.block_until_ready(downsample1d(x))
    ref_id = _reference(x)
    assert out_id.shape == (N, Ci, T // 2), out_id.shape
    assert jnp.allclose(out_id, ref_id, atol=TOL, rtol=TOL), float(
        jnp.max(jnp.abs(out_id - ref_id)))

    # ---- larger odd-length case: exercises 256-chunk loop + padding path ----
    N2, Ci2, Co2, T2 = 2, 16, 24, 601
    x2 = jax.random.normal(kx2, (N2, Ci2, T2), jnp.float32)
    limit2 = 1.0 / math.sqrt(Ci2)
    w2 = jax.random.uniform(kw2, (Co2, Ci2), jnp.float32, minval=-limit2, maxval=limit2)
    b2 = jax.random.uniform(kb2, (Co2,), jnp.float32, minval=-limit2, maxval=limit2)

    out2 = jax.block_until_ready(downsample1d(x2, w2, b2))
    ref2 = _reference(x2, w2, b2)
    assert out2.shape == (N2, Co2, T2 // 2), out2.shape
    assert jnp.allclose(out2, ref2, atol=TOL, rtol=TOL), float(
        jnp.max(jnp.abs(out2 - ref2)))

    print("KERNEL_OK")
</pallas_src>

<mosaic_0001>
module attributes {stable_mosaic.version = 11 : i64} {
  func.func @_avg2_expand_kernel(%arg0: i32, %arg1: i32, %arg2: memref<16x8xf32, #tpu.memory_space<vmem>>, %arg3: memref<64x32xf32, #tpu.memory_space<vmem>>, %arg4: memref<64x1xf32, #tpu.memory_space<vmem>>, %arg5: memref<1x32x16xf32, #tpu.memory_space<vmem>>, %arg6: memref<1x64x8xf32, #tpu.memory_space<vmem>>) attributes {dimension_semantics = [#tpu.dimension_semantics<parallel>, #tpu.dimension_semantics<parallel>], iteration_bounds = array<i64: 2, 1>, scalar_prefetch = 0 : i64, scratch_operands = 0 : i64, tpu.core_type = #tpu.core_type<tc>, window_params = [{pipeline_mode = #tpu.pipeline_mode<synchronous>, transform_indices = @transform_0, window_bounds = array<i64: 16, 8>}, {pipeline_mode = #tpu.pipeline_mode<synchronous>, transform_indices = @transform_1, window_bounds = array<i64: 64, 32>}, {pipeline_mode = #tpu.pipeline_mode<synchronous>, transform_indices = @transform_2, window_bounds = array<i64: 64, 1>}, {transform_indices = @transform_3, window_bounds = array<i64: 1, 32, 16>}, {transform_indices = @transform_4, window_bounds = array<i64: 1, 64, 8>}]} {
    %c0 = arith.constant 0 : index
    %c0_0 = arith.constant 0 : index
    %0 = vector.load %arg2[%c0, %c0_0] : memref<16x8xf32, #tpu.memory_space<vmem>>, vector<16x8xf32>
    %c0_1 = arith.constant 0 : index
    %c0_2 = arith.constant 0 : index
    %1 = vector.load %arg3[%c0_1, %c0_2] : memref<64x32xf32, #tpu.memory_space<vmem>>, vector<64x32xf32>
    %c0_3 = arith.constant 0 : index
    %c0_4 = arith.constant 0 : index
    %2 = vector.load %arg4[%c0_3, %c0_4] : memref<64x1xf32, #tpu.memory_space<vmem>>, vector<64x1xf32>
    %c0_5 = arith.constant 0 : index
    %c0_6 = arith.constant 0 : index
    %c0_7 = arith.constant 0 : index
    %3 = vector.load %arg5[%c0_5, %c0_6, %c0_7] : memref<1x32x16xf32, #tpu.memory_space<vmem>>, vector<1x32x16xf32>
    %4 = vector.shape_cast %3 : vector<1x32x16xf32> to vector<32x16xf32>
    %cst = arith.constant dense<0.000000e+00> : vector<32x8xf32>
    %5 = tpu.matmul %4, %0, %cst {dimension_numbers = #tpu.dot_dimension_numbers<[1], [0], [0], [1], [0, 0, 1, 1], [], []>} : vector<32x16xf32>, vector<16x8xf32>, vector<32x8xf32> -> vector<32x8xf32>
    %cst_8 = arith.constant dense<0.000000e+00> : vector<64x8xf32>
    %6 = tpu.matmul %1, %5, %cst_8 {dimension_numbers = #tpu.dot_dimension_numbers<[1], [0], [0], [1], [0, 0, 1, 1], [], []>} : vector<64x32xf32>, vector<32x8xf32>, vector<64x8xf32> -> vector<64x8xf32>
    %7 = vector.broadcast %2 : vector<64x1xf32> to vector<64x8xf32>
    %8 = arith.addf %6, %7 : vector<64x8xf32>
    %c0_9 = arith.constant 0 : index
    %c0_10 = arith.constant 0 : index
    %c0_11 = arith.constant 0 : index
    %9 = vector.load %arg6[%c0_9, %c0_10, %c0_11] : memref<1x64x8xf32, #tpu.memory_space<vmem>>, vector<1x64x8xf32>
    %10 = vector.shape_cast %9 : vector<1x64x8xf32> to vector<64x8xf32>
    %11 = vector.shape_cast %8 : vector<64x8xf32> to vector<1x64x8xf32>
    tpu.vector_store %arg6[%c0_9, %c0_10, %c0_11], %11 {strides = array<i32>} : memref<1x64x8xf32, #tpu.memory_space<vmem>>, vector<1x64x8xf32>,
    return
  }
  func.func @transform_0(%arg0: i32, %arg1: i32) -> (i32, i32) {
    %c0_i32 = arith.constant 0 : i32
    %c0_i32_0 = arith.constant 0 : i32
    %c0_i32_1 = arith.constant 0 : i32
    return %c0_i32, %c0_i32_0 : i32, i32
  }
  func.func @transform_1(%arg0: i32, %arg1: i32) -> (i32, i32) {
    %c0_i32 = arith.constant 0 : i32
    %c0_i32_0 = arith.constant 0 : i32
    %c0_i32_1 = arith.constant 0 : i32
    return %c0_i32, %c0_i32_0 : i32, i32
  }
  func.func @transform_2(%arg0: i32, %arg1: i32) -> (i32, i32) {
    %c0_i32 = arith.constant 0 : i32
    %c0_i32_0 = arith.constant 0 : i32
    %c0_i32_1 = arith.constant 0 : i32
    return %c0_i32, %c0_i32_0 : i32, i32
  }
  func.func @transform_3(%arg0: i32, %arg1: i32) -> (i32, i32, i32) {
    %c0_i32 = arith.constant 0 : i32
    %c0_i32_0 = arith.constant 0 : i32
    return %arg0, %c0_i32, %arg1 : i32, i32, i32
  }
  func.func @transform_4(%arg0: i32, %arg1: i32) -> (i32, i32, i32) {
    %c0_i32 = arith.constant 0 : i32
    %c0_i32_0 = arith.constant 0 : i32
    return %arg0, %c0_i32, %arg1 : i32, i32, i32
  }
}

</mosaic_0001>

<llo_original>
// kernel: tpu_custom_call.1
$region0: #{tpu_custom_call.1}
  #allocation0 [shape = 'u32[]', space=smem, size = 0x4, offset = 0x4, fixed_abs, tag = 'smem constant byte address 0x4 - core index']
  #allocation1 [shape = 'u32[72,128]{1,0:T(1,128)}', space=vmem, size = 0x9000, scoped, tag = 'internal scratch']
  %s0 = inlined_call_operand.vmem [shape: f32[16,8], index: 0, kind: input, shape index: {}]
  %s1 = inlined_call_operand.vmem [shape: f32[64,32], index: 1, kind: input, shape index: {}]
  %s2 = inlined_call_operand.vmem [shape: f32[64,1], index: 2, kind: input, shape index: {}]
  %s3 = inlined_call_operand.vmem [shape: f32[2,32,16], index: 3, kind: input, shape index: {}]
  %s4 = inlined_call_operand.vmem [shape: f32[2,64,8], index: 4, kind: output, shape index: {}]
  %s5 = sld [smem:[#allocation0]]
  $region49: #{tpu_custom_call.1} parent=0
    _
  %s7 = ssub.s32 1, %s5
  %s8 = scalar_select 0, %s7, %s5
  loop: start=0, step=1, limit=4
  $region2: #{tpu_custom_call.1} parent=0 // loop_pre_header
    _
  $region3: #{tpu_custom_call.1} parent=0 // loop_header
    %s10 = sphi 0, %s14
    %p11 = scmp.ge.s32.totalorder %s10, 4
    %s17 = sphi 0, %s29
    %s18 = sphi 0, %s25
    %s19 = sphi 0, %s17
    %s20 = sphi 0, %s18
    %s21 = sphi 0, %s19
    %s22 = sphi 0, %s20
    %s30 = sphi 0, %s30
    %s32 = sphi 0, %s30
    %s33 = sphi 0, %s32
    %s47 = sphi 0, %s33
    %s51 = sphi 0, %s51
    %s53 = sphi 0, %s51
    %s54 = sphi 0, %s53
    %s68 = sphi 0, %s54
    %s72 = sphi 0, %s72
    %s74 = sphi 0, %s72
    %s75 = sphi 0, %s74
    %s89 = sphi 0, %s75
    %s97 = sphi 0, %s99
    %s100 = sphi 0, %s97
    %s101 = sphi 0, %s100
    %s117 = sphi 0, %s101
    %s125 = sphi 0, %s127
    %s128 = sphi 0, %s125
    %s129 = sphi 0, %s128
    %s145 = sphi 0, %s129
  $region4: #{tpu_custom_call.1} parent=0 // loop_header_branch
    %13 = sbr.rel (%p11) target = $region8
  $region5: #{tpu_custom_call.1} parent=0 // loop_body
    %s15 = ssub.s32 %s10, 1
    %s16 = ssub.s32 %s10, 2
    %s23 = sadd.s32 1, %s18
    %p24 = scmp.ge.s32.totalorder %s23, 1
    %s25 = scalar_select %p24, 0, %s23
    %s26 = sadd.s32 1, %s17
    %s27 = scalar_select %p24, %s26, %s17
    %p28 = scmp.ge.s32.totalorder %s27, 2
    %s29 = scalar_select %p28, 0, %s27
    %s31 = sadd.s32 %s30, 1
    %p34 = scmp.eq.s32.totalorder %s10, 1
    %p35 = scmp.ne.s32.totalorder %s30, %s32
    %p36 = scmp.eq.s32.totalorder %s10, 0
    %p37 = por %p35, %p36
    %p38 = scmp.ne.s32.totalorder %s30, %s32
    %p39 = scmp.eq.s32.totalorder %s15, 1
    %p40 = por %p38, %p39
    %p41 = scmp.ne.s32.totalorder %s32, %s33
    %p42 = scmp.eq.s32.totalorder %s15, 0
    %p43 = por %p41, %p42
    %p44 = scmp.ne.s32.totalorder %s32, %s33
    %p45 = scmp.eq.s32.totalorder %s16, 1
    %p46 = por %p44, %p45
    %p48 = scmp.ne.s32.totalorder %s33, %s47
    %p49 = scmp.eq.s32.totalorder %s16, 0
    %p50 = por %p48, %p49
    %s52 = sadd.s32 %s51, 1
    %p55 = scmp.eq.s32.totalorder %s10, 1
    %p56 = scmp.ne.s32.totalorder %s51, %s53
    %p57 = scmp.eq.s32.totalorder %s10, 0
    %p58 = por %p56, %p57
    %p59 = scmp.ne.s32.totalorder %s51, %s53
    %p60 = scmp.eq.s32.totalorder %s15, 1
    %p61 = por %p59, %p60
    %p62 = scmp.ne.s32.totalorder %s53, %s54
    %p63 = scmp.eq.s32.totalorder %s15, 0
    %p64 = por %p62, %p63
    %p65 = scmp.ne.s32.totalorder %s53, %s54
    %p66 = scmp.eq.s32.totalorder %s16, 1
    %p67 = por %p65, %p66
    %p69 = scmp.ne.s32.totalorder %s54, %s68
    %p70 = scmp.eq.s32.totalorder %s16, 0
    %p71 = por %p69, %p70
    %s73 = sadd.s32 %s72, 1
    %p76 = scmp.eq.s32.totalorder %s10, 1
    %p77 = scmp.ne.s32.totalorder %s72, %s74
    %p78 = scmp.eq.s32.totalorder %s10, 0
    %p79 = por %p77, %p78
    %p80 = scmp.ne.s32.totalorder %s72, %s74
    %p81 = scmp.eq.s32.totalorder %s15, 1
    %p82 = por %p80, %p81
    %p83 = scmp.ne.s32.totalorder %s74, %s75
    %p84 = scmp.eq.s32.totalorder %s15, 0
    %p85 = por %p83, %p84
    %p86 = scmp.ne.s32.totalorder %s74, %s75
    %p87 = scmp.eq.s32.totalorder %s16, 1
    %p88 = por %p86, %p87
    %p90 = scmp.ne.s32.totalorder %s75, %s89
    %p91 = scmp.eq.s32.totalorder %s16, 0
    %p92 = por %p90, %p91
    %s93 = ssub.s32 %s17, %s29
    %s94 = ssub.s32 %s18, %s25
    %s95 = sor.u32 %s93, %s94
    %p96 = scmp.eq.s32.totalorder %s95, 0
    %s98 = sadd.s32 %s97, 1
    %s99 = scalar_select %p96, %s97, %s98
    %p102 = pneg %p96
    %p103 = scmp.eq.s32.totalorder %s10, 1
    %p104 = por %p102, %p103
    %p105 = scmp.ne.s32.totalorder %s97, %s100
    %p106 = scmp.eq.s32.totalorder %s10, 0
    %p107 = por %p105, %p106
    %p108 = scmp.ne.s32.totalorder %s97, %s100
    %p109 = scmp.eq.s32.totalorder %s15, 1
    %p110 = por %p108, %p109
    %p111 = scmp.ne.s32.totalorder %s100, %s101
    %p112 = scmp.eq.s32.totalorder %s15, 0
    %p113 = por %p111, %p112
    %p114 = scmp.ne.s32.totalorder %s100, %s101
    %p115 = scmp.eq.s32.totalorder %s16, 1
    %p116 = por %p114, %p115
    %p118 = scmp.ne.s32.totalorder %s101, %s117
    %p119 = scmp.eq.s32.totalorder %s16, 0
    %p120 = por %p118, %p119
    %s121 = ssub.s32 %s17, %s29
    %s122 = ssub.s32 %s18, %s25
    %s123 = sor.u32 %s121, %s122
    %p124 = scmp.eq.s32.totalorder %s123, 0
    %s126 = sadd.s32 %s125, 1
    %s127 = scalar_select %p124, %s125, %s126
    %p130 = pneg %p124
    %p131 = scmp.eq.s32.totalorder %s10, 1
    %p132 = por %p130, %p131
    %p133 = scmp.ne.s32.totalorder %s125, %s128
    %p134 = scmp.eq.s32.totalorder %s10, 0
    %p135 = por %p133, %p134
    %p136 = scmp.ne.s32.totalorder %s125, %s128
    %p137 = scmp.eq.s32.totalorder %s15, 1
    %p138 = por %p136, %p137
    %p139 = scmp.ne.s32.totalorder %s128, %s129
    %p140 = scmp.eq.s32.totalorder %s15, 0
    %p141 = por %p139, %p140
    %p142 = scmp.ne.s32.totalorder %s128, %s129
    %p143 = scmp.eq.s32.totalorder %s16, 1
    %p144 = por %p142, %p143
    %p146 = scmp.ne.s32.totalorder %s129, %s145
    %p147 = scmp.eq.s32.totalorder %s16, 0
    %p148 = por %p146, %p147
    %p149 = scmp.le.s32.totalorder 1, %s10
    %p150 = scmp.lt.s32.totalorder %s10, 3
    %p151 = pnand %p149, %p150
    %p152 = pneg %p151
    // Predicated region
    $region9: #{tpu_custom_call.1} parent=5 // pred_check
      _
    $region10: #{tpu_custom_call.1} parent=5 // pred_check_branch
      %154 = sbr.rel (%p151) target = $region12
    $region11: #{tpu_custom_call.1} parent=5 // pred_region
      %s155 = ssub.s32 %s10, 1
      // Predicated region
      $region13: #{tpu_custom_call.1} parent=11 // pred_check
        %p156 = pneg %p43
      $region14: #{tpu_custom_call.1} parent=11 // pred_check_branch
        %158 = sbr.rel (%p156) target = $region16
      $region15: #{tpu_custom_call.1} parent=11 // pred_region
        _
      $region16: #{tpu_custom_call.1} parent=11 // pred_fallthru
        _
      // Predicated region
      $region17: #{tpu_custom_call.1} parent=11 // pred_check
        %p159 = pneg %p64
      $region18: #{tpu_custom_call.1} parent=11 // pred_check_branch
        %161 = sbr.rel (%p159) target = $region20
      $region19: #{tpu_custom_call.1} parent=11 // pred_region
        _
      $region20: #{tpu_custom_call.1} parent=11 // pred_fallthru
        _
      // Predicated region
      $region21: #{tpu_custom_call.1} parent=11 // pred_check
        %p162 = pneg %p85
      $region22: #{tpu_custom_call.1} parent=11 // pred_check_branch
        %164 = sbr.rel (%p162) target = $region24
      $region23: #{tpu_custom_call.1} parent=11 // pred_region
        _
      $region24: #{tpu_custom_call.1} parent=11 // pred_fallthru
        _
    $region12: #{tpu_custom_call.1} parent=5 // pred_fallthru
      _
    %p165 = scmp.lt.s32.totalorder %s10, 2
    // Predicated region
    $region25: #{tpu_custom_call.1} parent=5 // pred_check
      %p166 = pneg %p165
    $region26: #{tpu_custom_call.1} parent=5 // pred_check_branch
      %168 = sbr.rel (%p166) target = $region28
    $region27: #{tpu_custom_call.1} parent=5 // pred_region
      // Predicated region
      $region29: #{tpu_custom_call.1} parent=27 // pred_check
        %p169 = pneg %p107
      $region30: #{tpu_custom_call.1} parent=27 // pred_check_branch
        %171 = sbr.rel (%p169) target = $region32
      $region31: #{tpu_custom_call.1} parent=27 // pred_region
        %p172 = scmp.lt.s32.totalorder %s17, 1
        %s173 = scalar_select %p172, %s17, 1
        %p174 = scmp.lt.s32.totalorder %s18, 0
        %s175 = scalar_select %p174, %s18, 0
        %s176 = smul.addr %s173, 4
        %s177 = sadd.s32 %s175, %s176
        %s178 = smul.addr %s177, 8
        %s179 = scalar_lea.vmem %s3, %s178
      $region32: #{tpu_custom_call.1} parent=27 // pred_fallthru
        _
    $region28: #{tpu_custom_call.1} parent=5 // pred_fallthru
      _
    %p180 = scmp.le.s32.totalorder 1, %s10
    %p181 = scmp.lt.s32.totalorder %s10, 3
    %p182 = pnand %p180, %p181
    %p183 = pneg %p182
    // Predicated region
    $region33: #{tpu_custom_call.1} parent=5 // pred_check
      _
    $region34: #{tpu_custom_call.1} parent=5 // pred_check_branch
      %185 = sbr.rel (%p182) target = $region36
    $region35: #{tpu_custom_call.1} parent=5 // pred_region
      %s186 = ssub.s32 %s10, 1
      %p187 = pneg %p43
      %p188 = pneg %p40
      %p189 = pneg %p64
      %p190 = pneg %p61
      %p191 = pneg %p85
      %p192 = pneg %p82
      %p193 = scmp.lt.s32.totalorder %s19, 1
      %s194 = scalar_select %p193, %s19, 1
      %p195 = scmp.lt.s32.totalorder %s20, 0
      %s196 = scalar_select %p195, %s20, 0
      %s197 = smul.addr %s194, 4
      %s198 = sadd.s32 %s196, %s197
      %s199 = smul.addr %s198, 8
      %s200 = scalar_lea.vmem %s3, %s199
      %p201 = pneg %p113
      %p202 = pneg %p110
      %p203 = pneg %p141
      %p204 = pneg %p138
      %p205 = scmp.lt.s32.totalorder %s19, 1
      %s206 = scalar_select %p205, %s19, 1
      %p207 = scmp.lt.s32.totalorder %s20, 0
      %s208 = scalar_select %p207, %s20, 0
      %s209 = smul.addr %s206, 8
      %s210 = sadd.s32 %s208, %s209
      %s211 = smul.addr %s210, 8
      %s212 = scalar_lea.vmem %s4, %s211
      %p213 = scmp.lt.s32.totalorder %s19, 1
      %s214 = scalar_select %p213, %s19, 1
      %p215 = scmp.lt.s32.totalorder %s20, 0
      %s216 = scalar_select %p215, %s20, 0
      %s217 = smul.addr %s214, 4
      %s218 = sadd.s32 %s216, %s217
      %s219 = smul.addr %s218, 8
      %s220 = scalar_lea.vmem %s3, %s219
      %p221 = scmp.lt.s32.totalorder %s19, 1
      %s222 = scalar_select %p221, %s19, 1
      %p223 = scmp.lt.s32.totalorder %s20, 0
      %s224 = scalar_select %p223, %s20, 0
      %s225 = smul.addr %s222, 8
      %s226 = sadd.s32 %s224, %s225
      %s227 = smul.addr %s226, 8
      %s228 = scalar_lea.vmem %s4, %s227
      %v229 = vld [vmem:[%s0] sm:$0xff]
      %v230 = vld [vmem:[%s0 + $0x8] sm:$0xff]
      %v231 = vld [vmem:[%s1] sm:$0xff]
      %v232 = vld [vmem:[%s1 + $0x8] sm:$0xff]
      %v233 = vld [vmem:[%s1 + $0x10] sm:$0xff]
      %v234 = vld [vmem:[%s1 + $0x18] sm:$0xff]
      %v235 = vld [vmem:[%s1 + $0x20] sm:$0xff]
      %v236 = vld [vmem:[%s1 + $0x28] sm:$0xff]
      %v237 = vld [vmem:[%s1 + $0x30] sm:$0xff]
      %v238 = vld [vmem:[%s1 + $0x38] sm:$0xff]
      %v239 = vld [vmem:[%s2] sm:$0xff]
      %v240 = vld [vmem:[%s2 + $0x8] sm:$0xff]
      %v241 = vld [vmem:[%s2 + $0x10] sm:$0xff]
      %v242 = vld [vmem:[%s2 + $0x18] sm:$0xff]
      %v243 = vld [vmem:[%s2 + $0x20] sm:$0xff]
      %v244 = vld [vmem:[%s2 + $0x28] sm:$0xff]
      %v245 = vld [vmem:[%s2 + $0x30] sm:$0xff]
      %v246 = vld [vmem:[%s2 + $0x38] sm:$0xff]
      %v247 = vld [vmem:[%s220] sm:$0xff]
      %v248 = vld [vmem:[%s220 + $0x8] sm:$0xff]
      %v249 = vld [vmem:[%s220 + $0x10] sm:$0xff]
      %v250 = vld [vmem:[%s220 + $0x18] sm:$0xff]
      %vm251 = vcmask 130048
      %v253 = vsel %vm251, %v247, 0
      %v256 = vsel %vm251, %v248, 0
      %v259 = vsel %vm251, %v249, 0
      %v262 = vsel %vm251, %v250, 0
      %264 = vmatpush.msra.mxu0 0.0
      %265 = vmatpush.msra.mxu0 0.0
      %266 = vmatpush.msra.mxu0 0.0
      %267 = vmatpush.msra.mxu0 0.0
      %268 = vmatpush.msra.mxu0 0.0
      %269 = vmatpush.msra.mxu0 0.0
      %270 = vmatpush.msra.mxu0 0.0
      %271 = vmatpush.msra.mxu0 0.0
      %272 = vmatpush.msra.mxu0 0.0
      %273 = vmatpush.msra.mxu0 0.0
      %274 = vmatpush.msra.mxu0 0.0
      %275 = vmatpush.msra.mxu0 0.0
      %276 = vmatpush.msra.mxu0 0.0
      %277 = vmatpush.msra.mxu0 0.0
      %278 = vmatpush.msra.mxu0 %v230
      %279 = vmatpush.msra.mxu0 %v229
      %280 = vmatmul.f32.gmra.mxu0 %v253
      %v281 = vpop.f32.mrf.mxu0
      %v282 = vadd.f32 0.0, %v281
      %283 = vmatmul.f32.gmra.mxu0 %v256
      %v284 = vpop.f32.mrf.mxu0
      %v285 = vadd.f32 0.0, %v284
      %286 = vmatmul.f32.gmra.mxu0 %v259
      %v287 = vpop.f32.mrf.mxu0
      %v288 = vadd.f32 0.0, %v287
      %289 = vmatmul.f32.gmra.mxu0 %v262
      %v290 = vpop.f32.mrf.mxu0
      %v291 = vadd.f32 0.0, %v290
      %292 = vdwg.mxu0
      %294 = vset.pattern.permute.xlu0 0
      %295 = vperm.xlu0 %294, %v239
      %v296 = vpop.permute.xlu0 %295
      %299 = vset.pattern.permute.xlu0 0
      %300 = vperm.xlu0 %299, %v240
      %v301 = vpop.permute.xlu0 %300
      %304 = vset.pattern.permute.xlu0 0
      %305 = vperm.xlu0 %304, %v241
      %v306 = vpop.permute.xlu0 %305
      %309 = vset.pattern.permute.xlu0 0
      %310 = vperm.xlu0 %309, %v242
      %v311 = vpop.permute.xlu0 %310
      %314 = vset.pattern.permute.xlu0 0
      %315 = vperm.xlu0 %314, %v243
      %v316 = vpop.permute.xlu0 %315
      %319 = vset.pattern.permute.xlu0 0
      %320 = vperm.xlu0 %319, %v244
      %v321 = vpop.permute.xlu0 %320
      %324 = vset.pattern.permute.xlu0 0
      %325 = vperm.xlu0 %324, %v245
      %v326 = vpop.permute.xlu0 %325
      %329 = vset.pattern.permute.xlu0 0
      %330 = vperm.xlu0 %329, %v246
      %v331 = vpop.permute.xlu0 %330
      %vm333 = vcmask 261120
      %v335 = vsel %vm333, %v231, 0
      %v338 = vsel %vm333, %v232, 0
      %v341 = vsel %vm333, %v233, 0
      %v344 = vsel %vm333, %v234, 0
      %v347 = vsel %vm333, %v235, 0
      %v350 = vsel %vm333, %v236, 0
      %v353 = vsel %vm333, %v237, 0
      %v356 = vsel %vm333, %v238, 0
      %358 = vmatpush.msra.mxu0 0.0
      %359 = vmatpush.msra.mxu0 0.0
      %360 = vmatpush.msra.mxu0 0.0
      %361 = vmatpush.msra.mxu0 0.0
      %362 = vmatpush.msra.mxu0 0.0
      %363 = vmatpush.msra.mxu0 0.0
      %364 = vmatpush.msra.mxu0 0.0
      %365 = vmatpush.msra.mxu0 0.0
      %366 = vmatpush.msra.mxu0 0.0
      %367 = vmatpush.msra.mxu0 0.0
      %368 = vmatpush.msra.mxu0 0.0
      %369 = vmatpush.msra.mxu0 0.0
      %370 = vmatpush.msra.mxu0 %v291
      %371 = vmatpush.msra.mxu0 %v288
      %372 = vmatpush.msra.mxu0 %v285
      %373 = vmatpush.msra.mxu0 %v282
      %374 = vmatmul.f32.gmra.mxu0 %v335
      %v375 = vpop.f32.mrf.mxu0
      %v376 = vadd.f32 %v296, %v375
      %377 = vmatmul.f32.gmra.mxu0 %v338
      %v378 = vpop.f32.mrf.mxu0
      %v379 = vadd.f32 %v301, %v378
      %380 = vmatmul.f32.gmra.mxu0 %v341
      %v381 = vpop.f32.mrf.mxu0
      %v382 = vadd.f32 %v306, %v381
      %383 = vmatmul.f32.gmra.mxu0 %v344
      %v384 = vpop.f32.mrf.mxu0
      %v385 = vadd.f32 %v311, %v384
      %386 = vmatmul.f32.gmra.mxu0 %v347
      %v387 = vpop.f32.mrf.mxu0
      %v388 = vadd.f32 %v316, %v387
      %389 = vmatmul.f32.gmra.mxu0 %v350
      %v390 = vpop.f32.mrf.mxu0
      %v391 = vadd.f32 %v321, %v390
      %392 = vmatmul.f32.gmra.mxu0 %v353
      %v393 = vpop.f32.mrf.mxu0
      %v394 = vadd.f32 %v326, %v393
      %395 = vmatmul.f32.gmra.mxu0 %v356
      %v396 = vpop.f32.mrf.mxu0
      %v397 = vadd.f32 %v331, %v396
      %398 = vdwg.mxu0
      %vm399 = vcmask 64512
      %400 = vst.msk [vmem:[%s228] sm:$0xff] %vm399, %v376
      %401 = vst.msk [vmem:[%s228 + $0x8] sm:$0xff] %vm399, %v379
      %402 = vst.msk [vmem:[%s228 + $0x10] sm:$0xff] %vm399, %v382
      %403 = vst.msk [vmem:[%s228 + $0x18] sm:$0xff] %vm399, %v385
      %404 = vst.msk [vmem:[%s228 + $0x20] sm:$0xff] %vm399, %v388
      %405 = vst.msk [vmem:[%s228 + $0x28] sm:$0xff] %vm399, %v391
      %406 = vst.msk [vmem:[%s228 + $0x30] sm:$0xff] %vm399, %v394
      %407 = vst.msk [vmem:[%s228 + $0x38] sm:$0xff] %vm399, %v397
      %p408 = scmp.lt.s32.totalorder %s19, 1
      %s409 = scalar_select %p408, %s19, 1
      %p410 = scmp.lt.s32.totalorder %s20, 0
      %s411 = scalar_select %p410, %s20, 0
      %s412 = smul.addr %s409, 8
      %s413 = sadd.s32 %s411, %s412
      %s414 = smul.addr %s413, 8
      %s415 = scalar_lea.vmem %s4, %s414
      // Predicated region
      $region37: #{tpu_custom_call.1} parent=35 // pred_check
        %p416 = pneg %p138
      $region38: #{tpu_custom_call.1} parent=35 // pred_check_branch
        %418 = sbr.rel (%p416) target = $region40
      $region39: #{tpu_custom_call.1} parent=35 // pred_region
        _
      $region40: #{tpu_custom_call.1} parent=35 // pred_fallthru
        _
    $region36: #{tpu_custom_call.1} parent=5 // pred_fallthru
      _
    %p419 = scmp.le.s32.totalorder 2, %s10
    // Predicated region
    $region41: #{tpu_custom_call.1} parent=5 // pred_check
      %p420 = pneg %p419
    $region42: #{tpu_custom_call.1} parent=5 // pred_check_branch
      %422 = sbr.rel (%p420) target = $region44
    $region43: #{tpu_custom_call.1} parent=5 // pred_region
      %s423 = ssub.s32 %s10, 2
      // Predicated region
      $region45: #{tpu_custom_call.1} parent=43 // pred_check
        %p424 = pneg %p144
      $region46: #{tpu_custom_call.1} parent=43 // pred_check_branch
        %426 = sbr.rel (%p424) target = $region48
      $region47: #{tpu_custom_call.1} parent=43 // pred_region
        %p427 = scmp.lt.s32.totalorder %s21, 1
        %s428 = scalar_select %p427, %s21, 1
        %p429 = scmp.lt.s32.totalorder %s22, 0
        %s430 = scalar_select %p429, %s22, 0
        %s431 = smul.addr %s428, 8
        %s432 = sadd.s32 %s430, %s431
        %s433 = smul.addr %s432, 8
        %s434 = scalar_lea.vmem %s4, %s433
      $region48: #{tpu_custom_call.1} parent=43 // pred_fallthru
        _
    $region44: #{tpu_custom_call.1} parent=5 // pred_fallthru
      _
  $region6: #{tpu_custom_call.1} parent=0 // loop_footer
    %s14 = sadd.s32 1, %s10
  $region7: #{tpu_custom_call.1} parent=0 // loop_footer_branch
    %9 = sbr.rel target = $region3
  $region8: #{tpu_custom_call.1} parent=0 // loop_exit
    _

</llo_original>
